<compile_context>
chip_gen: v7x
topology: tpu7x:2x2x1
jax: 0.10.0
libtpu: 0.0.40
codegen_flags: <defaults>
</compile_context>

<pallas_src>
import functools
import math

import jax
import jax.numpy as jnp
import numpy as np
from jax.experimental import pallas as pl
from jax.experimental.pallas import tpu as pltpu


def _round_up(n, m):
    return ((n + m - 1) // m) * m


@functools.lru_cache(maxsize=1)
def _roll_is_forward():
    """Probe pltpu.roll's rotation direction once (np.roll-like => 'forward')."""
    def kern(x_ref, o_ref):
        o_ref[...] = pltpu.roll(x_ref[...], 1, 0)

    x = jnp.arange(8 * 128, dtype=jnp.float32).reshape(8, 128)
    out = pl.pallas_call(
        kern,
        out_shape=jax.ShapeDtypeStruct((8, 128), jnp.float32),
        in_specs=[pl.BlockSpec(memory_space=pltpu.MemorySpace.VMEM)],
        out_specs=pl.BlockSpec(memory_space=pltpu.MemorySpace.VMEM),
    )(x)
    # np.roll-like: out[1, 0] == x[0, 0] == 0.
    return bool(np.asarray(jax.block_until_ready(out))[1, 0] == 0.0)


# --------------------------------------------------------------------------------
# Kernel
# --------------------------------------------------------------------------------
def make_kernel(num_blocks, kernel_size, dilations, roll_forward):
    """Ref order: x, [w_im2col, b, gamma, beta]*num_blocks, wq, bq, wkv, bkv, wl, bl, out."""
    n_in = 1 + 4 * num_blocks + 6

    def kernel(*refs):
        x_ref = refs[0]
        out_ref = refs[n_in]

        B, S, cin0 = x_ref.shape
        BS = B * S

        # Activations live as a flattened (B*S, C) f32 matrix between stages.
        h_flat = x_ref[...].astype(jnp.float32).reshape(BS, cin0)
        idx = 1

        # ---- TCN blocks: causal dilated conv (im2col) -> BatchNorm -> ReLU ----
        for blk in range(num_blocks):
            w_ref, b_ref, g_ref, be_ref = refs[idx:idx + 4]
            idx += 4
            dil = dilations[blk]
            cin_p = h_flat.shape[1]

            # Per-row time index t in [0, S); rows with t < shift are in the causal
            # zero-pad region of that tap (also kills roll wrap / batch bleed-over).
            t_idx = jax.lax.broadcasted_iota(jnp.int32, (BS, cin_p), 0) % S

            # im2col slab: K causally-shifted copies of h concatenated along lanes
            # (128-aligned lane concat).  Shifts are XLU sublane rolls + VPU mask —
            # entirely in vregs, no staging buffer.  The whole dilated conv is then
            # ONE (BS, K*cin_p) @ (K*cin_p, cout_p) MXU matmul (accumulation inside
            # the MXU instead of K pops + VPU adds).
            taps = []
            for j in range(kernel_size):
                shift = (kernel_size - 1 - j) * dil
                if shift == 0:
                    taps.append(h_flat)
                else:
                    amt = shift if roll_forward else BS - shift
                    rolled = pltpu.roll(h_flat, amt, 0)
                    taps.append(jnp.where(t_idx >= shift, rolled,
                                          jnp.zeros_like(rolled)))
            slab = taps[0] if kernel_size == 1 else jnp.concatenate(taps, axis=-1)

            acc = jnp.dot(slab.astype(w_ref.dtype), w_ref[...],
                          preferred_element_type=jnp.float32) + b_ref[...]

            # BatchNorm1d (training mode): one-pass biased stats over batch*seq, f32.
            inv_n = 1.0 / BS
            s1 = jnp.sum(acc, axis=0, keepdims=True)
            s2 = jnp.sum(acc * acc, axis=0, keepdims=True)
            mean = s1 * inv_n
            var = jnp.maximum(s2 * inv_n - mean * mean, 0.0)
            hn = (acc - mean) * jax.lax.rsqrt(var + 1e-5)
            h_flat = jnp.maximum(hn * g_ref[...] + be_ref[...], 0.0)   # ReLU, f32

        # ---- Self-attention (last time-step only) + linear head ----
        wq_ref, bq_ref, wkv_ref, bkv_ref, wl_ref, bl_ref = refs[idx:idx + 6]
        cp = wq_ref.shape[0]
        mxu = wq_ref.dtype

        h2 = h_flat                                   # (BS, C)
        h3 = h2.reshape(B, S, cp)

        # K and V for all positions: one fused (B*S, C) @ (C, 2C) matmul.
        kv = jnp.dot(h2.astype(mxu), wkv_ref[...],
                     preferred_element_type=jnp.float32) + bkv_ref[...]
        k3 = kv[:, :cp].reshape(B, S, cp)
        v3 = kv[:, cp:].reshape(B, S, cp)

        # Q only for the final time step, as a single 2D dot; 1/sqrt(d_k) is
        # pre-folded into wq/bq at pack time.
        h_last = h3[:, S - 1:S, :].reshape(B, cp)
        q2 = jnp.dot(h_last.astype(mxu), wq_ref[...],
                     preferred_element_type=jnp.float32) + bq_ref[...]
        q3 = q2.reshape(B, 1, cp)

        scores = jnp.einsum('bqd,bkd->bqk', q3.astype(mxu), k3.astype(mxu),
                            preferred_element_type=jnp.float32)        # (B, 1, S)
        m = jnp.max(scores, axis=-1, keepdims=True)
        e = jnp.exp(scores - m)
        denom = jnp.sum(e, axis=-1, keepdims=True)
        p = e * pl.reciprocal(denom, approx=True)                      # softmax, f32
        attn = jnp.einsum('bqk,bkd->bqd', p.astype(mxu), v3.astype(mxu),
                          preferred_element_type=jnp.float32)          # (B, 1, C)

        out = jnp.sum(attn * wl_ref[...], axis=-1) + bl_ref[...]       # (B, 1)
        out_ref[...] = out.astype(out_ref.dtype)

    return kernel


# --------------------------------------------------------------------------------
# Wrapper: pack / pad / fuse parameters once, then one fused pallas_call
# --------------------------------------------------------------------------------
def _pack_inputs(x, params, kernel_size, dilations, mxu_dtype):
    lane = 128
    B, S, c_in = x.shape
    cin_p = _round_up(c_in, lane)
    # NOTE: padding x to 128 lanes in HBM is wasteful once B*S is large with tiny
    # c_in (see TODO at top); negligible at these shapes and keeps the first
    # block's im2col slab lane-aligned.
    x_p = jnp.pad(x.astype(jnp.float32), ((0, 0), (0, 0), (0, cin_p - c_in)))

    inputs = [x_p]
    prev_cp = cin_p
    for (w, b, gamma, beta), _dil in zip(params["blocks"], dilations):
        c_out, c_in_blk, ks = w.shape
        cout_p = _round_up(c_out, lane)
        # im2col weight: (K, Cin_p, Cout_p) -> (K*Cin_p, Cout_p); tap j <-> w[:, :, j].
        w_t = jnp.transpose(w, (2, 1, 0))
        w_t = jnp.pad(w_t, ((0, 0), (0, prev_cp - c_in_blk), (0, cout_p - c_out)))
        inputs += [
            w_t.reshape(ks * prev_cp, cout_p).astype(mxu_dtype),
            jnp.pad(b, (0, cout_p - c_out)).reshape(1, cout_p),
            jnp.pad(gamma, (0, cout_p - c_out)).reshape(1, cout_p),
            jnp.pad(beta, (0, cout_p - c_out)).reshape(1, cout_p),
        ]
        prev_cp = cout_p

    wq, bq, wk, bk, wv, bv = params["attn"]
    C = wq.shape[0]
    cp = prev_cp                                               # == round_up(C, 128)
    scale = 1.0 / math.sqrt(C)                                 # d_k = unpadded C

    def _pad_wt(wt):                                           # torch (out,in) -> (in_p,out_p)
        return jnp.pad(wt.T, ((0, cp - wt.shape[1]), (0, cp - wt.shape[0])))

    wq_p = (_pad_wt(wq) * scale).astype(mxu_dtype)
    bq_p = (jnp.pad(bq, (0, cp - C)) * scale).reshape(1, cp)
    wkv_p = jnp.concatenate([_pad_wt(wk), _pad_wt(wv)], axis=1).astype(mxu_dtype)
    bkv_p = jnp.concatenate([jnp.pad(bk, (0, cp - C)),
                             jnp.pad(bv, (0, cp - C))]).reshape(1, 2 * cp)
    wl, bl = params["head"]
    wl_p = jnp.pad(wl.reshape(-1), (0, cp - C)).reshape(1, cp)
    bl_p = bl.reshape(1, 1)
    inputs += [wq_p, bq_p, wkv_p, bkv_p, wl_p, bl_p]
    return inputs


def tcn_with_attention_pallas(x, params, *, kernel_size, dilations,
                              mxu_dtype=jnp.bfloat16):
    num_blocks = len(params["blocks"])
    inputs = _pack_inputs(x, params, kernel_size, dilations, mxu_dtype)
    B, S, _ = x.shape

    kernel = make_kernel(num_blocks, kernel_size, tuple(dilations),
                         roll_forward=_roll_is_forward())

    # Explicit VMEM budget (matters on v7x's 64 MiB): inputs + live activations.
    in_bytes = sum(int(a.size) * a.dtype.itemsize for a in inputs)
    act_bytes = B * S * 128 * 4 * (kernel_size + 8)
    vmem_limit = int(min(64 * 2**20, max(16 * 2**20, 4 * (in_bytes + act_bytes))))

    return pl.pallas_call(
        kernel,
        out_shape=jax.ShapeDtypeStruct((B, 1), jnp.float32),
        in_specs=[pl.BlockSpec(memory_space=pltpu.MemorySpace.VMEM)] * len(inputs),
        out_specs=pl.BlockSpec(memory_space=pltpu.MemorySpace.VMEM),
        compiler_params=pltpu.CompilerParams(vmem_limit_bytes=vmem_limit),
    )(*inputs)


# --------------------------------------------------------------------------------
# Deterministic parameter init (torch-layout parameters, no checkpoint load)
# --------------------------------------------------------------------------------
def init_params(key, input_size, num_channels, kernel_size):
    blocks = []
    c_in = input_size
    for c_out in num_channels:
        key, k1, k2, k3, k4 = jax.random.split(key, 5)
        blocks.append((
            0.1 * jax.random.normal(k1, (c_out, c_in, kernel_size), jnp.float32),  # Conv1d W
            0.1 * jax.random.normal(k2, (c_out,), jnp.float32),                    # Conv1d b
            1.0 + 0.1 * jax.random.normal(k3, (c_out,), jnp.float32),              # BN gamma
            0.1 * jax.random.normal(k4, (c_out,), jnp.float32),                    # BN beta
        ))
        c_in = c_out
    C = num_channels[-1]
    key, kq, kbq, kk, kbk, kv, kbv, kl, kbl = jax.random.split(key, 9)
    attn = (0.1 * jax.random.normal(kq, (C, C), jnp.float32),
            0.1 * jax.random.normal(kbq, (C,), jnp.float32),
            0.1 * jax.random.normal(kk, (C, C), jnp.float32),
            0.1 * jax.random.normal(kbk, (C,), jnp.float32),
            0.1 * jax.random.normal(kv, (C, C), jnp.float32),
            0.1 * jax.random.normal(kbv, (C,), jnp.float32))
    head = (0.1 * jax.random.normal(kl, (1, C), jnp.float32),
            0.1 * jax.random.normal(kbl, (1,), jnp.float32))
    return {"blocks": blocks, "attn": attn, "head": head}


# --------------------------------------------------------------------------------
# Pure-JAX reference mirroring the PyTorch forward (for a self-check)
# --------------------------------------------------------------------------------
def reference_forward(x, params, *, kernel_size, dilations):
    h = x.astype(jnp.float32)
    B, S, _ = h.shape
    for (w, b, gamma, beta), dil in zip(params["blocks"], dilations):
        c_out = w.shape[0]
        acc = jnp.zeros((B, S, c_out), jnp.float32) + b
        for j in range(kernel_size):
            shift = (kernel_size - 1 - j) * dil
            y = jnp.einsum('bsc,oc->bso', h, w[:, :, j])
            if shift > 0:
                y = jnp.pad(y, ((0, 0), (shift, 0), (0, 0)))[:, :S, :]
            acc = acc + y
        mean = acc.mean(axis=(0, 1), keepdims=True)
        var = ((acc - mean) ** 2).mean(axis=(0, 1), keepdims=True)
        h = jnp.maximum((acc - mean) * jax.lax.rsqrt(var + 1e-5) * gamma + beta, 0.0)
    wq, bq, wk, bk, wv, bv = params["attn"]
    Q = h @ wq.T + bq
    K_ = h @ wk.T + bk
    V = h @ wv.T + bv
    d_k = Q.shape[-1]
    scores = jnp.einsum('bqd,bkd->bqk', Q, K_) / jnp.sqrt(jnp.float32(d_k))
    aw = jax.nn.softmax(scores, axis=-1)
    attn = jnp.einsum('bqk,bkd->bqd', aw, V)
    last = attn[:, -1, :]
    wl, bl = params["head"]
    return last @ wl.T + bl


if __name__ == "__main__":
    B, S = 2, 16
    input_size = 4
    num_channels = [8, 8]
    kernel_size = 3
    dilations = (1, 2)

    key = jax.random.PRNGKey(0)
    kx, kp = jax.random.split(key)
    x = jax.random.normal(kx, (B, S, input_size), jnp.float32)
    params = init_params(kp, input_size, num_channels, kernel_size)

    ref = reference_forward(x, params, kernel_size=kernel_size, dilations=dilations)

    # f32 MXU operands (v5e-friendly).
    out_f32 = tcn_with_attention_pallas(x, params, kernel_size=kernel_size,
                                        dilations=dilations, mxu_dtype=jnp.float32)
    out_f32 = jax.block_until_ready(out_f32)
    np.testing.assert_allclose(np.asarray(out_f32), np.asarray(ref),
                               rtol=5e-3, atol=5e-3)

    # bf16 MXU operands (default; recommended on v6e/v7x).  BN/softmax stay f32.
    out_bf16 = tcn_with_attention_pallas(x, params, kernel_size=kernel_size,
                                         dilations=dilations, mxu_dtype=jnp.bfloat16)
    out_bf16 = jax.block_until_ready(out_bf16)
    np.testing.assert_allclose(np.asarray(out_bf16), np.asarray(ref),
                               rtol=5e-2, atol=5e-2)

    print("KERNEL_OK")
</pallas_src>

<mosaic_0001>
module attributes {stable_mosaic.version = 11 : i64} {
  func.func @kern(%arg0: memref<8x128xf32, #tpu.memory_space<vmem>>, %arg1: memref<8x128xf32, #tpu.memory_space<vmem>>) attributes {dimension_semantics = [], scalar_prefetch = 0 : i64, scratch_operands = 0 : i64, tpu.core_type = #tpu.core_type<tc>} {
    %c0 = arith.constant 0 : index
    %c0_0 = arith.constant 0 : index
    %0 = vector.load %arg0[%c0, %c0_0] : memref<8x128xf32, #tpu.memory_space<vmem>>, vector<8x128xf32>
    %c1_i32 = arith.constant 1 : i32
    %1 = tpu.dynamic_rotate %0 by %c1_i32 dim 0 : vector<8x128xf32>, i32 -> vector<8x128xf32>
    %c0_1 = arith.constant 0 : index
    %c0_2 = arith.constant 0 : index
    %2 = vector.load %arg1[%c0_1, %c0_2] : memref<8x128xf32, #tpu.memory_space<vmem>>, vector<8x128xf32>
    tpu.vector_store %arg1[%c0_1, %c0_2], %1 {strides = array<i32>} : memref<8x128xf32, #tpu.memory_space<vmem>>, vector<8x128xf32>,
    return
  }
}

</mosaic_0001>

<llo_original>
// kernel: tpu_custom_call.1
$region0: #{tpu_custom_call.1}
  #allocation0 [shape = 'u32[]', space=smem, size = 0x4, offset = 0x4, fixed_abs, tag = 'smem constant byte address 0x4 - core index']
  #allocation1 [shape = 'u32[144,128]{1,0:T(1,128)}', space=vmem, size = 0x12000, scoped, tag = 'internal scratch']
  %s0 = inlined_call_operand.hbm [shape: f32[8,128], index: 0, kind: input, shape index: {}]
  %s1 = inlined_call_operand.hbm [shape: f32[8,128], index: 1, kind: output, shape index: {}]
  %s2 = sld [smem:[#allocation0]]
  $region18: #{tpu_custom_call.1} parent=0
    _
  %s4 = ssub.s32 1, %s2
  %s5 = scalar_select 0, %s4, %s2
  $region1: #{tpu_custom_call.1} parent=0
    #allocation2 [shape = 'u8[4096]{0}', space=vmem, size = 0x1000, scoped, tag = 'input window, operand 0, single buffered']
    #allocation3 [shape = 's32[1]{0}', space=sflag, size = 0x4, scoped, tag = 'scoped memory for tpu_custom_call.1']
    #allocation4 [shape = 's32[1]{0}', space=sflag, size = 0x4, scoped, tag = 'scoped memory for tpu_custom_call.1']
    #allocation5 [shape = 'u8[4096]{0}', space=vmem, size = 0x1000, scoped, tag = 'output window, operand 0, single buffered']
    %6 = vsyncpa [#allocation3], 0
    %7 = vsyncpa [#allocation4], 0
    // Predicated region
    $region2: #{tpu_custom_call.1} parent=1 // pred_check
      _
    $region3: #{tpu_custom_call.1} parent=1 // pred_check_branch
      %9 = sbr.rel (0) target = $region5
    $region4: #{tpu_custom_call.1} parent=1 // pred_region
      %s11 = ssub.s32 128, 128
      %12 = vsyncadd [#allocation3], %s11
      %s14 = sshll.u32 [#allocation2], 4
      %s15 = int_to_ptr.vmem [resolvable:$true] %s14
      %17 = dma.hbm_to_vmem [thread:$0]  %s0, 128, %s15, [#allocation3]
    $region5: #{tpu_custom_call.1} parent=1 // pred_fallthru
      _
    // Predicated region
    $region6: #{tpu_custom_call.1} parent=1 // pred_check
      _
    $region7: #{tpu_custom_call.1} parent=1 // pred_check_branch
      %19 = sbr.rel (0) target = $region9
    $region8: #{tpu_custom_call.1} parent=1 // pred_region
      %20 = dma.done [#allocation3], 128
    $region9: #{tpu_custom_call.1} parent=1 // pred_fallthru
      _
    %v21 = vld [vmem:[#allocation2] sm:$0xff]
    %v22 = vrot.slane %v21, 7
    %23 = vst [vmem:[#allocation5] sm:$0xff] %v22
    // Predicated region
    $region10: #{tpu_custom_call.1} parent=1 // pred_check
      _
    $region11: #{tpu_custom_call.1} parent=1 // pred_check_branch
      %25 = sbr.rel (0) target = $region13
    $region12: #{tpu_custom_call.1} parent=1 // pred_region
      %s27 = ssub.s32 128, 128
      %28 = vsyncadd [#allocation4], %s27
      %s30 = sshll.u32 [#allocation5], 4
      %s31 = int_to_ptr.vmem [resolvable:$true] %s30
      %33 = dma.vmem_to_hbm [thread:$0]  %s31, 128, %s1, [#allocation4]
    $region13: #{tpu_custom_call.1} parent=1 // pred_fallthru
      _
    // Predicated region
    $region14: #{tpu_custom_call.1} parent=1 // pred_check
      _
    $region15: #{tpu_custom_call.1} parent=1 // pred_check_branch
      %35 = sbr.rel (0) target = $region17
    $region16: #{tpu_custom_call.1} parent=1 // pred_region
      %36 = dma.done [#allocation4], 128
    $region17: #{tpu_custom_call.1} parent=1 // pred_fallthru
      _
    %37 = vsyncpa [#allocation3], 1
    %38 = vsyncpa [#allocation4], 1

</llo_original>
